<compile_context>
chip_gen: v7x
topology: tpu7x:2x2x1
jax: 0.10.0
libtpu: 0.0.40
codegen_flags: <defaults>
</compile_context>

<pallas_src>
import functools

import jax
import jax.numpy as jnp
import numpy as np
from jax.experimental import pallas as pl
from jax.experimental.pallas import tpu as pltpu


def _conv_lstm_kernel(comb_ref, w_ref, c_ref, out_ref, *, pack_lanes):
    """One batch tile per grid step.

    comb_ref : (bt, L+2p, Cu)  channels-last [x, h, 1] slab, halo-padded
    w_ref    : (k, Cu, 4H)     per-tap weights; bias in the ones-row of the
                               center tap; i/f/o channels pre-scaled by 0.5
    c_ref    : (bt, L, H)      current cell state (channels-last)
    out_ref  : (bt, L, 2H)     if not pack_lanes
               (1, L, bt*2H)   if pack_lanes (batch packed along lanes)
    """
    bt, L, H = c_ref.shape
    Cu = comb_ref.shape[-1]
    k = w_ref.shape[0]
    rows = bt * L
    H4 = 4 * H

    # On-chip im2col: one MXU matmul per conv tap, accumulated in f32.  The
    # tap windows are overlapping static slices of the VMEM-resident slab, so
    # HBM only ever sees the un-expanded activation.
    gates = jnp.dot(comb_ref[:, 0:L, :].reshape(rows, Cu), w_ref[0],
                    preferred_element_type=jnp.float32)
    for t in range(1, k):  # k is small & static -> unrolled
        window = comb_ref[:, t:t + L, :].reshape(rows, Cu)
        gates = gates + jnp.dot(window, w_ref[t],
                                preferred_element_type=jnp.float32)

    # Single full-width EUP pass: tanh over all 4H lanes, then an affine
    # (0.5*t + 0.5 on the pre-scaled i/f/o lanes, identity on g) recovers
    # sigmoid(i), sigmoid(f), sigmoid(o), tanh(g).
    lane = jax.lax.broadcasted_iota(jnp.int32, (1, H4), 1)
    is_sig = lane < 3 * H
    scale = jnp.where(is_sig, 0.5, 1.0).astype(jnp.float32)
    shift = jnp.where(is_sig, 0.5, 0.0).astype(jnp.float32)
    act = jnp.tanh(gates) * scale + shift

    i = act[:, 0 * H:1 * H]
    f = act[:, 1 * H:2 * H]
    o = act[:, 2 * H:3 * H]
    g = act[:, 3 * H:4 * H]

    c_cur = c_ref[...].reshape(rows, H).astype(jnp.float32)
    c_next = f * c_cur + i * g
    h_next = o * jnp.tanh(c_next)

    hc = jnp.concatenate([h_next, c_next], axis=-1)     # (rows, 2H)
    hc3 = hc.reshape(bt, L, 2 * H)                      # major-dim expand only
    if pack_lanes:
        # Pack the bt batch elements side-by-side along lanes so the store is
        # >=128 lanes wide (avoids masked vst when 2H < 128).
        packed = jnp.concatenate([hc3[j:j + 1] for j in range(bt)], axis=-1)
        out_ref[...] = packed.astype(out_ref.dtype)
    else:
        out_ref[...] = hc3.astype(out_ref.dtype)


def _num_tensorcores():
    """Best effort: v7x exposes 2 TensorCores per chip; v5e/v6e have 1."""
    try:
        kind = jax.devices()[0].device_kind.lower()
        if "v7" in kind:
            return 2
    except Exception:
        pass
    return 1


def _pick_batch_tile(B, L, Lp, Cu, H, k, tensorcores):
    """Largest divisor of B whose double-buffered per-step working set fits a
    conservative VMEM budget (sized for v7x's 64 MiB physical VMEM), capped at
    ~4096 rows per step.  Only split into >=2 grid steps when >=2 TensorCores
    are available; each extra grid step costs ~0.35 us on a single-TC chip."""
    if L % 8 != 0:
        # Keep the in-kernel (bt, L, *) -> (bt*L, *) collapse layout-trivial.
        return 1
    itemsize = 4
    weight_bytes = k * Cu * 4 * H * itemsize

    def step_bytes(bt):
        comb = bt * Lp * Cu
        c = bt * L * H
        out = bt * L * 2 * H
        return (comb + c + out) * itemsize

    budget = 24 * 1024 * 1024 - 2 * weight_bytes
    divisors = sorted(d for d in range(1, B + 1) if B % d == 0)
    fits = [d for d in divisors if 2 * step_bytes(d) <= budget] or [1]
    capped = [d for d in fits if d * L <= 4096] or [fits[0]]
    bt = max(capped)
    if tensorcores >= 2 and B // bt < 2:
        # v7x: keep >=2 "parallel" grid steps so both TensorCores are used,
        # as long as each step keeps a reasonable M.
        halves = [d for d in fits if B // d >= 2 and d * L >= 128]
        if halves:
            bt = max(halves)
    return bt


@functools.partial(jax.jit, static_argnames=("kernel_size",))
def conv_lstm_cell(x, h_cur, c_cur, weight, bias, *, kernel_size):
    """ConvLSTMCell forward (PyTorch layout conventions).

    x      : (B, C_in, L)          float32
    h_cur  : (B, H, L)             float32
    c_cur  : (B, H, L)             float32
    weight : (4*H, C_in + H, k)    Conv1d weight
    bias   : (4*H,)                Conv1d bias
    Returns (h_next, c_next), each (B, H, L).
    """
    B, C_in, L = x.shape
    H = h_cur.shape[1]
    k = kernel_size
    if k % 2 != 1:
        raise ValueError("conv_lstm_cell requires an odd kernel_size (even k "
                         "is not well-defined in the reference module).")
    pad = k // 2
    Lp = L + 2 * pad
    C_comb = C_in + H
    Cu = C_comb + 1          # +1: constant ones channel carrying the bias
    f32 = jnp.float32

    # --- channels-last glue (tiny; plain XLA) -------------------------------
    # TODO(synk): channels-last (B, L, C) end-to-end in the caller would
    # delete these transposes and the ones at the end.
    x_t = jnp.transpose(x.astype(f32), (0, 2, 1))            # (B, L, C_in)
    h_t = jnp.transpose(h_cur.astype(f32), (0, 2, 1))        # (B, L, H)
    c_t = jnp.transpose(c_cur.astype(f32), (0, 2, 1))        # (B, L, H)
    ones = jnp.ones((B, L, 1), f32)
    comb = jnp.concatenate([x_t, h_t, ones], axis=-1)        # (B, L, Cu)
    comb_p = jnp.pad(comb, ((0, 0), (pad, pad), (0, 0)))     # (B, Lp, Cu)

    # --- weight packing ------------------------------------------------------
    # Conv1d weight (4H, C_comb, k) -> per-tap (k, C_comb, 4H).  Bias goes in
    # the ones-row of the CENTER tap (the ones channel is 1 exactly on the L
    # real positions the center tap reads).  The 0.5 sigmoid pre-scale is
    # folded into the i/f/o output channels and bias lanes.
    gate_scale = jnp.concatenate(
        [jnp.full((3 * H,), 0.5, f32), jnp.ones((H,), f32)])
    w_s = weight.astype(f32) * gate_scale[:, None, None]      # (4H, C_comb, k)
    b_s = bias.astype(f32) * gate_scale                       # (4H,)
    w_taps = jnp.transpose(w_s, (2, 1, 0))                    # (k, C_comb, 4H)
    bias_rows = jnp.zeros((k, 1, 4 * H), f32).at[pad, 0, :].set(b_s)
    w_packed = jnp.concatenate([w_taps, bias_rows], axis=1)   # (k, Cu, 4H)

    # --- tiling ---------------------------------------------------------------
    tcs = _num_tensorcores()
    bt = _pick_batch_tile(B, L, Lp, Cu, H, k, tcs)
    nb = B // bt
    # Widen the store (pack batch along lanes) when 2H is not lane-dense; keep
    # the lane fan-in bounded so the in-kernel concat stays cheap.
    pack_lanes = ((2 * H) % 128 != 0) and (bt * 2 * H <= 1024)

    if pack_lanes:
        out_shape = jax.ShapeDtypeStruct((nb, L, bt * 2 * H), f32)
        out_spec = pl.BlockSpec((1, L, bt * 2 * H), lambda i: (i, 0, 0))
    else:
        out_shape = jax.ShapeDtypeStruct((B, L, 2 * H), f32)
        out_spec = pl.BlockSpec((bt, L, 2 * H), lambda i: (i, 0, 0))

    grid_spec = pltpu.PrefetchScalarGridSpec(
        num_scalar_prefetch=0,
        grid=(nb,),
        in_specs=[
            pl.BlockSpec((bt, Lp, Cu), lambda i: (i, 0, 0)),     # [x,h,1] slab
            pl.BlockSpec((k, Cu, 4 * H), lambda i: (0, 0, 0)),   # weights
            pl.BlockSpec((bt, L, H), lambda i: (i, 0, 0)),       # c_cur
        ],
        out_specs=out_spec,
    )

    out = pl.pallas_call(
        functools.partial(_conv_lstm_kernel, pack_lanes=pack_lanes),
        out_shape=out_shape,
        grid_spec=grid_spec,
        compiler_params=pltpu.CompilerParams(
            # Batch tiles are independent -> shard across TCs on v7x.
            dimension_semantics=("parallel",),
            # Explicit budget: above the 16/32 MiB scoped default, safely
            # below v7x's 64 MiB physical VMEM.
            vmem_limit_bytes=48 * 1024 * 1024,
        ),
    )(comb_p, w_packed, c_t)

    # --- unpack back to the PyTorch (B, H, L) layout -------------------------
    if pack_lanes:
        hc = out.reshape(nb, L, bt, 2 * H).transpose(0, 2, 1, 3)
        hc = hc.reshape(B, L, 2 * H)
    else:
        hc = out
    h_next = jnp.transpose(hc[:, :, :H], (0, 2, 1))
    c_next = jnp.transpose(hc[:, :, H:], (0, 2, 1))
    return h_next, c_next


def _reference_forward(x, h_cur, c_cur, weight, bias, pad):
    """Pure-JAX reference mirroring the PyTorch module (for validation)."""
    comb = jnp.concatenate([x, h_cur], axis=1)          # (B, C_comb, L)
    out = jax.lax.conv_general_dilated(
        comb, weight,
        window_strides=(1,), padding=[(pad, pad)],
        dimension_numbers=("NCH", "OIH", "NCH"),
    )
    out = out + bias[None, :, None]
    H = h_cur.shape[1]
    cc_i, cc_f, cc_o, cc_g = jnp.split(out, 4, axis=1)
    i = jax.nn.sigmoid(cc_i)
    f = jax.nn.sigmoid(cc_f)
    o = jax.nn.sigmoid(cc_o)
    g = jnp.tanh(cc_g)
    c_next = f * c_cur + i * g
    h_next = o * jnp.tanh(c_next)
    return h_next, c_next


if __name__ == "__main__":
    # Small shapes consistent with the module's forward.
    B, C_in, H, L, K = 2, 4, 32, 16, 3
    C_comb = C_in + H

    key = jax.random.PRNGKey(0)
    kx, kh, kc, kw, kb = jax.random.split(key, 5)

    x = jax.random.normal(kx, (B, C_in, L), dtype=jnp.float32)
    h_cur = jax.random.normal(kh, (B, H, L), dtype=jnp.float32)
    c_cur = jax.random.normal(kc, (B, H, L), dtype=jnp.float32)

    # Deterministic parameter init (PyTorch Conv1d-style uniform bound).
    fan_in = C_comb * K
    bound = 1.0 / np.sqrt(fan_in)
    weight = jax.random.uniform(
        kw, (4 * H, C_comb, K), minval=-bound, maxval=bound, dtype=jnp.float32)
    bias = jax.random.uniform(
        kb, (4 * H,), minval=-bound, maxval=bound, dtype=jnp.float32)

    h_next, c_next = conv_lstm_cell(
        x, h_cur, c_cur, weight, bias, kernel_size=K)
    jax.block_until_ready((h_next, c_next))

    h_ref, c_ref = _reference_forward(x, h_cur, c_cur, weight, bias, K // 2)
    np.testing.assert_allclose(np.asarray(h_next), np.asarray(h_ref),
                               rtol=1e-5, atol=1e-5)
    np.testing.assert_allclose(np.asarray(c_next), np.asarray(c_ref),
                               rtol=1e-5, atol=1e-5)

    print("KERNEL_OK")
</pallas_src>

<mosaic_0001>
module attributes {stable_mosaic.version = 11 : i64} {
  func.func @_conv_lstm_kernel(%arg0: i32, %arg1: memref<2x18x37xf32, #tpu.memory_space<vmem>>, %arg2: memref<3x37x128xf32, #tpu.memory_space<vmem>>, %arg3: memref<2x16x32xf32, #tpu.memory_space<vmem>>, %arg4: memref<1x16x128xf32, #tpu.memory_space<vmem>>) attributes {dimension_semantics = [#tpu.dimension_semantics<parallel>], iteration_bounds = array<i64: 1>, scalar_prefetch = 0 : i64, scratch_operands = 0 : i64, tpu.core_type = #tpu.core_type<tc>, window_params = [{transform_indices = @transform_0, window_bounds = array<i64: 2, 18, 37>}, {pipeline_mode = #tpu.pipeline_mode<synchronous>, transform_indices = @transform_1, window_bounds = array<i64: 3, 37, 128>}, {transform_indices = @transform_2, window_bounds = array<i64: 2, 16, 32>}, {transform_indices = @transform_3, window_bounds = array<i64: 1, 16, 128>}]} {
    %c0 = arith.constant 0 : index
    %c0_0 = arith.constant 0 : index
    %c0_1 = arith.constant 0 : index
    %0 = vector.load %arg1[%c0, %c0_0, %c0_1] : memref<2x18x37xf32, #tpu.memory_space<vmem>>, vector<2x16x37xf32>
    %1 = vector.shape_cast %0 : vector<2x16x37xf32> to vector<32x37xf32>
    %c0_2 = arith.constant 0 : index
    %c0_3 = arith.constant 0 : index
    %c0_4 = arith.constant 0 : index
    %2 = vector.load %arg2[%c0_2, %c0_3, %c0_4] : memref<3x37x128xf32, #tpu.memory_space<vmem>>, vector<1x37x128xf32>
    %3 = vector.shape_cast %2 : vector<1x37x128xf32> to vector<37x128xf32>
    %cst = arith.constant dense<0.000000e+00> : vector<32x128xf32>
    %4 = tpu.matmul %1, %3, %cst {dimension_numbers = #tpu.dot_dimension_numbers<[1], [0], [0], [1], [0, 0, 1, 1], [], []>} : vector<32x37xf32>, vector<37x128xf32>, vector<32x128xf32> -> vector<32x128xf32>
    %c0_5 = arith.constant 0 : index
    %c1 = arith.constant 1 : index
    %c0_6 = arith.constant 0 : index
    %5 = vector.load %arg1[%c0_5, %c1, %c0_6] : memref<2x18x37xf32, #tpu.memory_space<vmem>>, vector<2x16x37xf32>
    %6 = vector.shape_cast %5 : vector<2x16x37xf32> to vector<32x37xf32>
    %c1_7 = arith.constant 1 : index
    %c0_8 = arith.constant 0 : index
    %c0_9 = arith.constant 0 : index
    %7 = vector.load %arg2[%c1_7, %c0_8, %c0_9] : memref<3x37x128xf32, #tpu.memory_space<vmem>>, vector<1x37x128xf32>
    %8 = vector.shape_cast %7 : vector<1x37x128xf32> to vector<37x128xf32>
    %cst_10 = arith.constant dense<0.000000e+00> : vector<32x128xf32>
    %9 = tpu.matmul %6, %8, %cst_10 {dimension_numbers = #tpu.dot_dimension_numbers<[1], [0], [0], [1], [0, 0, 1, 1], [], []>} : vector<32x37xf32>, vector<37x128xf32>, vector<32x128xf32> -> vector<32x128xf32>
    %10 = arith.addf %4, %9 : vector<32x128xf32>
    %c0_11 = arith.constant 0 : index
    %c2 = arith.constant 2 : index
    %c0_12 = arith.constant 0 : index
    %11 = vector.load %arg1[%c0_11, %c2, %c0_12] : memref<2x18x37xf32, #tpu.memory_space<vmem>>, vector<2x16x37xf32>
    %12 = vector.shape_cast %11 : vector<2x16x37xf32> to vector<32x37xf32>
    %c2_13 = arith.constant 2 : index
    %c0_14 = arith.constant 0 : index
    %c0_15 = arith.constant 0 : index
    %13 = vector.load %arg2[%c2_13, %c0_14, %c0_15] : memref<3x37x128xf32, #tpu.memory_space<vmem>>, vector<1x37x128xf32>
    %14 = vector.shape_cast %13 : vector<1x37x128xf32> to vector<37x128xf32>
    %cst_16 = arith.constant dense<0.000000e+00> : vector<32x128xf32>
    %15 = tpu.matmul %12, %14, %cst_16 {dimension_numbers = #tpu.dot_dimension_numbers<[1], [0], [0], [1], [0, 0, 1, 1], [], []>} : vector<32x37xf32>, vector<37x128xf32>, vector<32x128xf32> -> vector<32x128xf32>
    %16 = arith.addf %10, %15 : vector<32x128xf32>
    %17 = tpu.iota {dimensions = array<i32: 1>} : vector<1x128xi32>
    %c96_i32 = arith.constant 96 : i32
    %18 = vector.broadcast %c96_i32 : i32 to vector<1x128xi32>
    %19 = arith.cmpi slt, %17, %18 : vector<1x128xi32>
    %cst_17 = arith.constant 5.000000e-01 : f32
    %cst_18 = arith.constant 1.000000e+00 : f32
    %20 = vector.broadcast %cst_17 : f32 to vector<1x128xf32>
    %21 = vector.broadcast %cst_18 : f32 to vector<1x128xf32>
    %22 = arith.select %19, %20, %21 : vector<1x128xi1>, vector<1x128xf32>
    %cst_19 = arith.constant 5.000000e-01 : f32
    %cst_20 = arith.constant 0.000000e+00 : f32
    %23 = vector.broadcast %cst_19 : f32 to vector<1x128xf32>
    %24 = vector.broadcast %cst_20 : f32 to vector<1x128xf32>
    %25 = arith.select %19, %23, %24 : vector<1x128xi1>, vector<1x128xf32>
    %26 = math.tanh %16 : vector<32x128xf32>
    %27 = vector.broadcast %22 : vector<1x128xf32> to vector<32x128xf32>
    %28 = arith.mulf %26, %27 : vector<32x128xf32>
    %29 = vector.broadcast %25 : vector<1x128xf32> to vector<32x128xf32>
    %30 = arith.addf %28, %29 : vector<32x128xf32>
    %31 = vector.extract_strided_slice %30 {offsets = [0, 0], sizes = [32, 32], strides = [1, 1]} : vector<32x128xf32> to vector<32x32xf32>
    %32 = vector.extract_strided_slice %30 {offsets = [0, 32], sizes = [32, 32], strides = [1, 1]} : vector<32x128xf32> to vector<32x32xf32>
    %33 = vector.extract_strided_slice %30 {offsets = [0, 64], sizes = [32, 32], strides = [1, 1]} : vector<32x128xf32> to vector<32x32xf32>
    %34 = vector.extract_strided_slice %30 {offsets = [0, 96], sizes = [32, 32], strides = [1, 1]} : vector<32x128xf32> to vector<32x32xf32>
    %c0_21 = arith.constant 0 : index
    %c0_22 = arith.constant 0 : index
    %c0_23 = arith.constant 0 : index
    %35 = vector.load %arg3[%c0_21, %c0_22, %c0_23] : memref<2x16x32xf32, #tpu.memory_space<vmem>>, vector<2x16x32xf32>
    %36 = vector.shape_cast %35 : vector<2x16x32xf32> to vector<32x32xf32>
    %37 = arith.mulf %32, %36 : vector<32x32xf32>
    %38 = arith.mulf %31, %34 : vector<32x32xf32>
    %39 = arith.addf %37, %38 : vector<32x32xf32>
    %40 = math.tanh %39 : vector<32x32xf32>
    %41 = arith.mulf %33, %40 : vector<32x32xf32>
    %42 = tpu.concatenate %41, %39 in 1 : vector<32x32xf32>, vector<32x32xf32> -> vector<32x64xf32>
    %43 = vector.shape_cast %42 : vector<32x64xf32> to vector<2x16x64xf32>
    %44 = vector.extract_strided_slice %43 {offsets = [0, 0, 0], sizes = [1, 16, 64], strides = [1, 1, 1]} : vector<2x16x64xf32> to vector<1x16x64xf32>
    %45 = vector.extract_strided_slice %43 {offsets = [1, 0, 0], sizes = [1, 16, 64], strides = [1, 1, 1]} : vector<2x16x64xf32> to vector<1x16x64xf32>
    %46 = tpu.concatenate %44, %45 in 2 : vector<1x16x64xf32>, vector<1x16x64xf32> -> vector<1x16x128xf32>
    %c0_24 = arith.constant 0 : index
    %c0_25 = arith.constant 0 : index
    %c0_26 = arith.constant 0 : index
    %47 = vector.load %arg4[%c0_24, %c0_25, %c0_26] : memref<1x16x128xf32, #tpu.memory_space<vmem>>, vector<1x16x128xf32>
    tpu.vector_store %arg4[%c0_24, %c0_25, %c0_26], %46 {strides = array<i32>} : memref<1x16x128xf32, #tpu.memory_space<vmem>>, vector<1x16x128xf32>,
    return
  }
  func.func @transform_0(%arg0: i32) -> (i32, i32, i32) {
    %c0_i32 = arith.constant 0 : i32
    %c0_i32_0 = arith.constant 0 : i32
    %c0_i32_1 = arith.constant 0 : i32
    return %arg0, %c0_i32, %c0_i32_0 : i32, i32, i32
  }
  func.func @transform_1(%arg0: i32) -> (i32, i32, i32) {
    %c0_i32 = arith.constant 0 : i32
    %c0_i32_0 = arith.constant 0 : i32
    %c0_i32_1 = arith.constant 0 : i32
    %c0_i32_2 = arith.constant 0 : i32
    return %c0_i32, %c0_i32_0, %c0_i32_1 : i32, i32, i32
  }
  func.func @transform_2(%arg0: i32) -> (i32, i32, i32) {
    %c0_i32 = arith.constant 0 : i32
    %c0_i32_0 = arith.constant 0 : i32
    %c0_i32_1 = arith.constant 0 : i32
    return %arg0, %c0_i32, %c0_i32_0 : i32, i32, i32
  }
  func.func @transform_3(%arg0: i32) -> (i32, i32, i32) {
    %c0_i32 = arith.constant 0 : i32
    %c0_i32_0 = arith.constant 0 : i32
    %c0_i32_1 = arith.constant 0 : i32
    return %arg0, %c0_i32, %c0_i32_0 : i32, i32, i32
  }
}

</mosaic_0001>

<llo_original>
// kernel: conv_lstm_cell.1
$region0: #{conv_lstm_cell.1}
  #allocation0 [shape = 'u32[]', space=smem, size = 0x4, offset = 0x4, fixed_abs, tag = 'smem constant byte address 0x4 - core index']
  #allocation1 [shape = 'u32[144,128]{1,0:T(1,128)}', space=vmem, size = 0x12000, scoped, tag = 'internal scratch']
  %s0 = inlined_call_operand.vmem [shape: f32[2,18,37], index: 0, kind: input, shape index: {}]
  %s1 = inlined_call_operand.vmem [shape: f32[3,37,128], index: 1, kind: input, shape index: {}]
  %s2 = inlined_call_operand.vmem [shape: f32[2,16,32], index: 2, kind: input, shape index: {}]
  %s3 = inlined_call_operand.vmem [shape: f32[1,16,128], index: 3, kind: output, shape index: {}]
  %s4 = sld [smem:[#allocation0]]
  $region22: #{conv_lstm_cell.1} parent=0
    _
  %s6 = ssub.s32 1, %s4
  %s7 = scalar_select 0, %s6, %s4
  // Predicated region
  $region2: #{conv_lstm_cell.1} parent=0 // pred_check
    _
  $region3: #{conv_lstm_cell.1} parent=0 // pred_check_branch
    %9 = sbr.rel (0) target = $region5
  $region4: #{conv_lstm_cell.1} parent=0 // pred_region
    _
  $region5: #{conv_lstm_cell.1} parent=0 // pred_fallthru
    _
  // Predicated region
  $region6: #{conv_lstm_cell.1} parent=0 // pred_check
    _
  $region7: #{conv_lstm_cell.1} parent=0 // pred_check_branch
    %11 = sbr.rel (0) target = $region9
  $region8: #{conv_lstm_cell.1} parent=0 // pred_region
    _
  $region9: #{conv_lstm_cell.1} parent=0 // pred_fallthru
    _
  // Predicated region
  $region10: #{conv_lstm_cell.1} parent=0 // pred_check
    _
  $region11: #{conv_lstm_cell.1} parent=0 // pred_check_branch
    %13 = sbr.rel (0) target = $region13
  $region12: #{conv_lstm_cell.1} parent=0 // pred_region
    _
  $region13: #{conv_lstm_cell.1} parent=0 // pred_fallthru
    _
  %v14 = vld [vmem:[%s0] sm:$0xff]
  %v15 = vld [vmem:[%s0 + $0x8] sm:$0xff]
  %v16 = vld [vmem:[%s0 + $0x18] sm:$0xff]
  %v17 = vld [vmem:[%s0 + $0x20] sm:$0xff]
  %v18 = vld [vmem:[%s1] sm:$0xff]
  %v19 = vld [vmem:[%s1 + $0x8] sm:$0xff]
  %v20 = vld [vmem:[%s1 + $0x10] sm:$0xff]
  %v21 = vld [vmem:[%s1 + $0x18] sm:$0xff]
  %v22 = vld [vmem:[%s1 + $0x20] sm:$0x1f]
  %v23 = vld [vmem:[%s0 + $0x1] sm:$0xff]
  %v24 = vld [vmem:[%s0 + $0x9] sm:$0xff]
  %v25 = vld [vmem:[%s0 + $0x19] sm:$0xff]
  %v26 = vld [vmem:[%s0 + $0x21] sm:$0xff]
  %s27 = scalar_lea.vmem %s1, 40
  %v28 = vld [vmem:[%s27] sm:$0xff]
  %v29 = vld [vmem:[%s27 + $0x8] sm:$0xff]
  %v30 = vld [vmem:[%s27 + $0x10] sm:$0xff]
  %v31 = vld [vmem:[%s27 + $0x18] sm:$0xff]
  %v32 = vld [vmem:[%s27 + $0x20] sm:$0x1f]
  %vm33 = vcmask 302080
  %v35 = vsel %vm33, %v23, 0
  %v38 = vsel %vm33, %v24, 0
  %v41 = vsel %vm33, %v25, 0
  %v44 = vsel %vm33, %v26, 0
  %vm46 = vcmask 1044480
  %v48 = vsel %vm46, %v32, 0
  %50 = vmatprep.subr.mxu0 0.0
  %51 = vmatpush1.msra.mxu0 %v28
  %52 = vmatprep.subr.mxu0 0.0
  %53 = vmatpush1.msra.mxu0 %v29
  %54 = vmatprep.subr.mxu0 0.0
  %55 = vmatpush1.msra.mxu0 %v30
  %56 = vmatprep.subr.mxu0 0.0
  %57 = vmatpush1.msra.mxu0 %v31
  %58 = vmatprep.subr.mxu0 0.0
  %59 = vmatpush1.msra.mxu0 %v48
  %60 = vmatprep.subr.mxu0 0.0
  %61 = vmatpush1.msra.mxu0 0.0
  %62 = vmatprep.subr.mxu0 0.0
  %63 = vmatpush1.msra.mxu0 0.0
  %64 = vmatprep.subr.mxu0 0.0
  %65 = vmatpush1.msra.mxu0 0.0
  %66 = vmatprep.subr.mxu0 0.0
  %67 = vmatpush1.msra.mxu0 0.0
  %68 = vmatprep.subr.mxu0 0.0
  %69 = vmatpush1.msra.mxu0 0.0
  %70 = vmatprep.subr.mxu0 0.0
  %71 = vmatpush1.msra.mxu0 0.0
  %72 = vmatprep.subr.mxu0 0.0
  %73 = vmatpush1.msra.mxu0 0.0
  %74 = vmatprep.subr.mxu0 0.0
  %75 = vmatpush1.msra.mxu0 0.0
  %76 = vmatprep.subr.mxu0 0.0
  %77 = vmatpush1.msra.mxu0 0.0
  %78 = vmatprep.subr.mxu0 0.0
  %79 = vmatpush1.msra.mxu0 0.0
  %80 = vmatprep.subr.mxu0 0.0
  %81 = vmatpush1.msra.mxu0 0.0
  %82 = vmatprep.subr.mxu0 0.0
  %83 = vmatpush1.msra.mxu0 0.0
  %84 = vmatprep.subr.mxu0 0.0
  %85 = vmatpush1.msra.mxu0 0.0
  %86 = vmatprep.subr.mxu0 0.0
  %87 = vmatpush1.msra.mxu0 0.0
  %88 = vmatprep.subr.mxu0 0.0
  %89 = vmatpush1.msra.mxu0 0.0
  %90 = vmatprep.subr.mxu0 0.0
  %91 = vmatpush1.msra.mxu0 0.0
  %92 = vmatprep.subr.mxu0 0.0
  %93 = vmatpush1.msra.mxu0 0.0
  %94 = vmatprep.subr.mxu0 0.0
  %95 = vmatpush1.msra.mxu0 0.0
  %96 = vmatprep.subr.mxu0 0.0
  %97 = vmatpush1.msra.mxu0 0.0
  %98 = vmatprep.subr.mxu0 0.0
  %99 = vmatpush1.msra.mxu0 0.0
  %100 = vmatprep.subr.mxu0 0.0
  %101 = vmatpush1.msra.mxu0 0.0
  %102 = vmatprep.subr.mxu0 0.0
  %103 = vmatpush1.msra.mxu0 0.0
  %104 = vmatprep.subr.mxu0 0.0
  %105 = vmatpush1.msra.mxu0 0.0
  %106 = vmatprep.subr.mxu0 0.0
  %107 = vmatpush1.msra.mxu0 0.0
  %108 = vmatprep.subr.mxu0 0.0
  %109 = vmatpush1.msra.mxu0 0.0
  %110 = vmatprep.subr.mxu0 0.0
  %111 = vmatpush1.msra.mxu0 0.0
  %112 = vmatprep.subr.mxu0 0.0
  %113 = vmatpush1.msra.mxu0 0.0
  %114 = vmatprep.mubr.f32.mxu0 0.0
  %115 = vmatmul.mubr.f32.gmra.mrb[0].mxu0 %v35
  %v116 = vpop.f32.mrb[0].mxu0
  %v117 = vadd.f32 0.0, %v116
  %v118 = vpop.f32.mrb[0].mxu0
  %119 = vmatprep.mubr.f32.mxu0 0.0
  %120 = vmatmul.mubr.f32.gmra.mrb[0].mxu0 %v38
  %v121 = vpop.f32.mrb[0].mxu0
  %v122 = vadd.f32 0.0, %v121
  %v123 = vpop.f32.mrb[0].mxu0
  %124 = vmatprep.mubr.f32.mxu0 0.0
  %125 = vmatmul.mubr.f32.gmra.mrb[0].mxu0 %v41
  %v126 = vpop.f32.mrb[0].mxu0
  %v127 = vadd.f32 0.0, %v126
  %v128 = vpop.f32.mrb[0].mxu0
  %129 = vmatprep.mubr.f32.mxu0 0.0
  %130 = vmatmul.mubr.f32.gmra.mrb[0].mxu0 %v44
  %v131 = vpop.f32.mrb[0].mxu0
  %v132 = vadd.f32 0.0, %v131
  %v133 = vpop.f32.mrb[0].mxu0
  %134 = vdwg.mxu0
  %v136 = vsel %vm33, %v14, 0
  %v139 = vsel %vm33, %v15, 0
  %v142 = vsel %vm33, %v16, 0
  %v145 = vsel %vm33, %v17, 0
  %v148 = vsel %vm46, %v22, 0
  %150 = vmatprep.subr.mxu0 0.0
  %151 = vmatpush1.msra.mxu0 %v18
  %152 = vmatprep.subr.mxu0 0.0
  %153 = vmatpush1.msra.mxu0 %v19
  %154 = vmatprep.subr.mxu0 0.0
  %155 = vmatpush1.msra.mxu0 %v20
  %156 = vmatprep.subr.mxu0 0.0
  %157 = vmatpush1.msra.mxu0 %v21
  %158 = vmatprep.subr.mxu0 0.0
  %159 = vmatpush1.msra.mxu0 %v148
  %160 = vmatprep.subr.mxu0 0.0
  %161 = vmatpush1.msra.mxu0 0.0
  %162 = vmatprep.subr.mxu0 0.0
  %163 = vmatpush1.msra.mxu0 0.0
  %164 = vmatprep.subr.mxu0 0.0
  %165 = vmatpush1.msra.mxu0 0.0
  %166 = vmatprep.subr.mxu0 0.0
  %167 = vmatpush1.msra.mxu0 0.0
  %168 = vmatprep.subr.mxu0 0.0
  %169 = vmatpush1.msra.mxu0 0.0
  %170 = vmatprep.subr.mxu0 0.0
  %171 = vmatpush1.msra.mxu0 0.0
  %172 = vmatprep.subr.mxu0 0.0
  %173 = vmatpush1.msra.mxu0 0.0
  %174 = vmatprep.subr.mxu0 0.0
  %175 = vmatpush1.msra.mxu0 0.0
  %176 = vmatprep.subr.mxu0 0.0
  %177 = vmatpush1.msra.mxu0 0.0
  %178 = vmatprep.subr.mxu0 0.0
  %179 = vmatpush1.msra.mxu0 0.0
  %180 = vmatprep.subr.mxu0 0.0
  %181 = vmatpush1.msra.mxu0 0.0
  %182 = vmatprep.subr.mxu0 0.0
  %183 = vmatpush1.msra.mxu0 0.0
  %184 = vmatprep.subr.mxu0 0.0
  %185 = vmatpush1.msra.mxu0 0.0
  %186 = vmatprep.subr.mxu0 0.0
  %187 = vmatpush1.msra.mxu0 0.0
  %188 = vmatprep.subr.mxu0 0.0
  %189 = vmatpush1.msra.mxu0 0.0
  %190 = vmatprep.subr.mxu0 0.0
  %191 = vmatpush1.msra.mxu0 0.0
  %192 = vmatprep.subr.mxu0 0.0
  %193 = vmatpush1.msra.mxu0 0.0
  %194 = vmatprep.subr.mxu0 0.0
  %195 = vmatpush1.msra.mxu0 0.0
  %196 = vmatprep.subr.mxu0 0.0
  %197 = vmatpush1.msra.mxu0 0.0
  %198 = vmatprep.subr.mxu0 0.0
  %199 = vmatpush1.msra.mxu0 0.0
  %200 = vmatprep.subr.mxu0 0.0
  %201 = vmatpush1.msra.mxu0 0.0
  %202 = vmatprep.subr.mxu0 0.0
  %203 = vmatpush1.msra.mxu0 0.0
  %204 = vmatprep.subr.mxu0 0.0
  %205 = vmatpush1.msra.mxu0 0.0
  %206 = vmatprep.subr.mxu0 0.0
  %207 = vmatpush1.msra.mxu0 0.0
  %208 = vmatprep.subr.mxu0 0.0
  %209 = vmatpush1.msra.mxu0 0.0
  %210 = vmatprep.subr.mxu0 0.0
  %211 = vmatpush1.msra.mxu0 0.0
  %212 = vmatprep.subr.mxu0 0.0
  %213 = vmatpush1.msra.mxu0 0.0
  %214 = vmatprep.mubr.f32.mxu0 0.0
  %215 = vmatmul.mubr.f32.gmra.mrb[0].mxu0 %v136
  %v216 = vpop.f32.mrb[0].mxu0
  %v217 = vadd.f32 %v117, %v216
  %v218 = vpop.f32.mrb[0].mxu0
  %219 = vmatprep.mubr.f32.mxu0 0.0
  %220 = vmatmul.mubr.f32.gmra.mrb[0].mxu0 %v139
  %v221 = vpop.f32.mrb[0].mxu0
  %v222 = vadd.f32 %v122, %v221
  %v223 = vpop.f32.mrb[0].mxu0
  %224 = vmatprep.mubr.f32.mxu0 0.0
  %225 = vmatmul.mubr.f32.gmra.mrb[0].mxu0 %v142
  %v226 = vpop.f32.mrb[0].mxu0
  %v227 = vadd.f32 %v127, %v226
  %v228 = vpop.f32.mrb[0].mxu0
  %229 = vmatprep.mubr.f32.mxu0 0.0
  %230 = vmatmul.mubr.f32.gmra.mrb[0].mxu0 %v145
  %v231 = vpop.f32.mrb[0].mxu0
  %v232 = vadd.f32 %v132, %v231
  %v233 = vpop.f32.mrb[0].mxu0
  %234 = vdwg.mxu0
  %v235 = vld [vmem:[%s0 + $0x2] sm:$0xff]
  %v236 = vld [vmem:[%s0 + $0xa] sm:$0xff]
  %v237 = vld [vmem:[%s0 + $0x1a] sm:$0xff]
  %v238 = vld [vmem:[%s0 + $0x22] sm:$0xff]
  %s239 = scalar_lea.vmem %s1, 80
  %v240 = vld [vmem:[%s239] sm:$0xff]
  %v241 = vld [vmem:[%s239 + $0x8] sm:$0xff]
  %v242 = vld [vmem:[%s239 + $0x10] sm:$0xff]
  %v243 = vld [vmem:[%s239 + $0x18] sm:$0xff]
  %v244 = vld [vmem:[%s239 + $0x20] sm:$0x1f]
  %v246 = vsel %vm33, %v235, 0
  %v249 = vsel %vm33, %v236, 0
  %v252 = vsel %vm33, %v237, 0
  %v255 = vsel %vm33, %v238, 0
  %v258 = vsel %vm46, %v244, 0
  %260 = vmatprep.subr.mxu0 0.0
  %261 = vmatpush1.msra.mxu0 %v240
  %262 = vmatprep.subr.mxu0 0.0
  %263 = vmatpush1.msra.mxu0 %v241
  %264 = vmatprep.subr.mxu0 0.0
  %265 = vmatpush1.msra.mxu0 %v242
  %266 = vmatprep.subr.mxu0 0.0
  %267 = vmatpush1.msra.mxu0 %v243
  %268 = vmatprep.subr.mxu0 0.0
  %269 = vmatpush1.msra.mxu0 %v258
  %270 = vmatprep.subr.mxu0 0.0
  %271 = vmatpush1.msra.mxu0 0.0
  %272 = vmatprep.subr.mxu0 0.0
  %273 = vmatpush1.msra.mxu0 0.0
  %274 = vmatprep.subr.mxu0 0.0
  %275 = vmatpush1.msra.mxu0 0.0
  %276 = vmatprep.subr.mxu0 0.0
  %277 = vmatpush1.msra.mxu0 0.0
  %278 = vmatprep.subr.mxu0 0.0
  %279 = vmatpush1.msra.mxu0 0.0
  %280 = vmatprep.subr.mxu0 0.0
  %281 = vmatpush1.msra.mxu0 0.0
  %282 = vmatprep.subr.mxu0 0.0
  %283 = vmatpush1.msra.mxu0 0.0
  %284 = vmatprep.subr.mxu0 0.0
  %285 = vmatpush1.msra.mxu0 0.0
  %286 = vmatprep.subr.mxu0 0.0
  %287 = vmatpush1.msra.mxu0 0.0
  %288 = vmatprep.subr.mxu0 0.0
  %289 = vmatpush1.msra.mxu0 0.0
  %290 = vmatprep.subr.mxu0 0.0
  %291 = vmatpush1.msra.mxu0 0.0
  %292 = vmatprep.subr.mxu0 0.0
  %293 = vmatpush1.msra.mxu0 0.0
  %294 = vmatprep.subr.mxu0 0.0
  %295 = vmatpush1.msra.mxu0 0.0
  %296 = vmatprep.subr.mxu0 0.0
  %297 = vmatpush1.msra.mxu0 0.0
  %298 = vmatprep.subr.mxu0 0.0
  %299 = vmatpush1.msra.mxu0 0.0
  %300 = vmatprep.subr.mxu0 0.0
  %301 = vmatpush1.msra.mxu0 0.0
  %302 = vmatprep.subr.mxu0 0.0
  %303 = vmatpush1.msra.mxu0 0.0
  %304 = vmatprep.subr.mxu0 0.0
  %305 = vmatpush1.msra.mxu0 0.0
  %306 = vmatprep.subr.mxu0 0.0
  %307 = vmatpush1.msra.mxu0 0.0
  %308 = vmatprep.subr.mxu0 0.0
  %309 = vmatpush1.msra.mxu0 0.0
  %310 = vmatprep.subr.mxu0 0.0
  %311 = vmatpush1.msra.mxu0 0.0
  %312 = vmatprep.subr.mxu0 0.0
  %313 = vmatpush1.msra.mxu0 0.0
  %314 = vmatprep.subr.mxu0 0.0
  %315 = vmatpush1.msra.mxu0 0.0
  %316 = vmatprep.subr.mxu0 0.0
  %317 = vmatpush1.msra.mxu0 0.0
  %318 = vmatprep.subr.mxu0 0.0
  %319 = vmatpush1.msra.mxu0 0.0
  %320 = vmatprep.subr.mxu0 0.0
  %321 = vmatpush1.msra.mxu0 0.0
  %322 = vmatprep.subr.mxu0 0.0
  %323 = vmatpush1.msra.mxu0 0.0
  %324 = vmatprep.mubr.f32.mxu0 0.0
  %325 = vmatmul.mubr.f32.gmra.mrb[0].mxu0 %v246
  %v326 = vpop.f32.mrb[0].mxu0
  %v327 = vadd.f32 0.0, %v326
  %v328 = vpop.f32.mrb[0].mxu0
  %329 = vmatprep.mubr.f32.mxu0 0.0
  %330 = vmatmul.mubr.f32.gmra.mrb[0].mxu0 %v249
  %v331 = vpop.f32.mrb[0].mxu0
  %v332 = vadd.f32 0.0, %v331
  %v333 = vpop.f32.mrb[0].mxu0
  %334 = vmatprep.mubr.f32.mxu0 0.0
  %335 = vmatmul.mubr.f32.gmra.mrb[0].mxu0 %v252
  %v336 = vpop.f32.mrb[0].mxu0
  %v337 = vadd.f32 0.0, %v336
  %v338 = vpop.f32.mrb[0].mxu0
  %339 = vmatprep.mubr.f32.mxu0 0.0
  %340 = vmatmul.mubr.f32.gmra.mrb[0].mxu0 %v255
  %v341 = vpop.f32.mrb[0].mxu0
  %v342 = vadd.f32 0.0, %v341
  %v343 = vpop.f32.mrb[0].mxu0
  %344 = vdwg.mxu0
  %v345 = vadd.f32 %v217, %v327
  %v346 = vadd.f32 %v222, %v332
  %v347 = vadd.f32 %v227, %v337
  %v348 = vadd.f32 %v232, %v342
  %v349 = vlaneseq
  %v350 = vand.u32 %v349, 127
  %vm351 = vcmp.lt.s32.totalorder %v350, 96
  %v352 = vsel %vm351, 0.5, 1.0
  %v353 = vsel %vm351, 0.5, 0.0
  %v354 = vtanh.pop %v345
  %v355 = vtanh.pop %v346
  %v356 = vtanh.pop %v347
  %v357 = vtanh.pop %v348
  %v358 = vmul.f32 %v354, %v352
  %v359 = vmul.f32 %v355, %v352
  %v360 = vmul.f32 %v356, %v352
  %v361 = vmul.f32 %v357, %v352
  %v362 = vadd.f32 %v358, %v353
  %v363 = vadd.f32 %v359, %v353
  %v364 = vadd.f32 %v360, %v353
  %v365 = vadd.f32 %v361, %v353
  %v366 = vld [vmem:[%s2] sm:$0xff]
  %v367 = vld [vmem:[%s2 + $0x8] sm:$0xff]
  %v368 = vld [vmem:[%s2 + $0x10] sm:$0xff]
  %v369 = vld [vmem:[%s2 + $0x18] sm:$0xff]
  %374 = vrot.lane.b32.xlu0 %v366, 32
  %v375 = vpop.permute.xlu0 %374
  %376 = vrot.lane.b32.xlu0 %v367, 32
  %v377 = vpop.permute.xlu0 %376
  %378 = vrot.lane.b32.xlu0 %v368, 32
  %v379 = vpop.permute.xlu0 %378
  %380 = vrot.lane.b32.xlu0 %v369, 32
  %v381 = vpop.permute.xlu0 %380
  %v386 = vmul.f32 %v362, %v375
  %v387 = vmul.f32 %v363, %v377
  %v388 = vmul.f32 %v364, %v379
  %v389 = vmul.f32 %v365, %v381
  %394 = vrot.lane.b32.xlu0 %v362, 32
  %v395 = vpop.permute.xlu0 %394
  %396 = vrot.lane.b32.xlu0 %v363, 32
  %v397 = vpop.permute.xlu0 %396
  %398 = vrot.lane.b32.xlu0 %v364, 32
  %v399 = vpop.permute.xlu0 %398
  %400 = vrot.lane.b32.xlu0 %v365, 32
  %v401 = vpop.permute.xlu0 %400
  %v406 = vmul.f32 %v362, %v395
  %v407 = vmul.f32 %v363, %v397
  %v408 = vmul.f32 %v364, %v399
  %v409 = vmul.f32 %v365, %v401
  %414 = vrot.lane.b32.xlu0 %v406, 32
  %v415 = vpop.permute.xlu0 %414
  %416 = vrot.lane.b32.xlu0 %v407, 32
  %v417 = vpop.permute.xlu0 %416
  %418 = vrot.lane.b32.xlu0 %v408, 32
  %v419 = vpop.permute.xlu0 %418
  %420 = vrot.lane.b32.xlu0 %v409, 32
  %v421 = vpop.permute.xlu0 %420
  %v426 = vadd.f32 %v386, %v415
  %v427 = vadd.f32 %v387, %v417
  %v428 = vadd.f32 %v388, %v419
  %v429 = vadd.f32 %v389, %v421
  %v430 = vtanh.pop %v426
  %v431 = vtanh.pop %v427
  %v432 = vtanh.pop %v428
  %v433 = vtanh.pop %v429
  %438 = vrot.lane.b32.xlu0 %v430, 32
  %v439 = vpop.permute.xlu0 %438
  %440 = vrot.lane.b32.xlu0 %v431, 32
  %v441 = vpop.permute.xlu0 %440
  %442 = vrot.lane.b32.xlu0 %v432, 32
  %v443 = vpop.permute.xlu0 %442
  %444 = vrot.lane.b32.xlu0 %v433, 32
  %v445 = vpop.permute.xlu0 %444
  %v450 = vmul.f32 %v362, %v439
  %v451 = vmul.f32 %v363, %v441
  %v452 = vmul.f32 %v364, %v443
  %v453 = vmul.f32 %v365, %v445
  %458 = vrot.lane.b32.xlu0 %v450, 64
  %v459 = vpop.permute.xlu0 %458
  %460 = vrot.lane.b32.xlu0 %v451, 64
  %v461 = vpop.permute.xlu0 %460
  %462 = vrot.lane.b32.xlu0 %v452, 64
  %v463 = vpop.permute.xlu0 %462
  %464 = vrot.lane.b32.xlu0 %v453, 64
  %v465 = vpop.permute.xlu0 %464
  %vm470 = vcmask 261120
  %v471 = vsel %vm470, %v459, %v426
  %v472 = vsel %vm470, %v461, %v427
  %v473 = vsel %vm470, %v463, %v428
  %v474 = vsel %vm470, %v465, %v429
  %477 = vrot.lane.b32.xlu0 %v473, 64
  %v478 = vpop.permute.xlu0 %477
  %479 = vrot.lane.b32.xlu0 %v474, 64
  %v480 = vpop.permute.xlu0 %479
  %vm483 = vcmask 523264
  %v484 = vsel %vm483, %v471, %v478
  %v485 = vsel %vm483, %v472, %v480
  %486 = vst [vmem:[%s3] sm:$0xff] %v484
  %487 = vst [vmem:[%s3 + $0x8] sm:$0xff] %v485
  // Predicated region
  $region14: #{conv_lstm_cell.1} parent=0 // pred_check
    _
  $region15: #{conv_lstm_cell.1} parent=0 // pred_check_branch
    %489 = sbr.rel (0) target = $region17
  $region16: #{conv_lstm_cell.1} parent=0 // pred_region
    _
  $region17: #{conv_lstm_cell.1} parent=0 // pred_fallthru
    _
  // Predicated region
  $region18: #{conv_lstm_cell.1} parent=0 // pred_check
    _
  $region19: #{conv_lstm_cell.1} parent=0 // pred_check_branch
    %491 = sbr.rel (0) target = $region21
  $region20: #{conv_lstm_cell.1} parent=0 // pred_region
    _
  $region21: #{conv_lstm_cell.1} parent=0 // pred_fallthru
    _

</llo_original>
